<compile_context>
chip_gen: v6e
topology: v6e:2x2x1
jax: 0.10.0
libtpu: 0.0.40
codegen_flags: <defaults>
</compile_context>

<pallas_src>
import functools

import jax
import jax.numpy as jnp
import numpy as np
from jax.experimental import pallas as pl
from jax.experimental.pallas import tpu as pltpu


def _round_up(x, m):
    return (x + m - 1) // m * m


def _mlp_kernel(*refs, p, training, n_layers):
    if training:
        x_ref, w_ref, b_ref, bits_ref, o_ref = refs
        threshold = jnp.uint32(min(int(round(p * 2.0**32)), 2**32 - 1))
        inv_keep = float(1.0 / (1.0 - p))
    else:
        x_ref, w_ref, b_ref, o_ref = refs
        bits_ref = None

    h = x_ref[...]
    for layer in range(n_layers):
        w = w_ref[layer]          # (D, D)   static index -> view, no copy
        b = b_ref[layer]          # (1, D)
        h = jnp.dot(h, w, preferred_element_type=jnp.float32) + b
        if layer < n_layers - 1:                      # no ReLU after fc10
            h = jnp.maximum(h, 0.0)
        if training and 5 <= layer <= 8:              # dropout after fc6..fc9
            keep = bits_ref[layer - 5] >= threshold   # P(keep) = 1 - p
            h = jnp.where(keep, h * inv_keep, 0.0)
    o_ref[...] = h.astype(o_ref.dtype)


def _pack_params(params, d):
    """Zero-pad every (in,out) weight / (out,) bias into shared slabs."""
    n = len(params)
    w_slab = np.zeros((n, d, d), np.float32)
    b_slab = np.zeros((n, 1, d), np.float32)
    for i, (w, b) in enumerate(params):
        w = np.asarray(w, np.float32)
        b = np.asarray(b, np.float32).reshape(-1)
        fi, fo = w.shape
        w_slab[i, :fi, :fo] = w
        b_slab[i, 0, :fo] = b
    return jnp.asarray(w_slab), jnp.asarray(b_slab)


def mlpnet10drop_forward(x, params, key=None, *, p=0.5, training=True,
                         max_block_rows=256):
    """params: list of (W, b) with W shaped (in_features, out_features)."""
    assert 0.0 <= p < 1.0, "dropout p must be in [0, 1)"
    n_layers = len(params)
    batch, n_input = x.shape
    n_classes = np.asarray(params[-1][1]).size

    # Shared padded feature width for all layers (>=32, multiple of 8).
    dims = [n_input] + [int(np.asarray(w).shape[1]) for w, _ in params]
    d = max(32, _round_up(max(dims), 8))

    block_b = min(max_block_rows, _round_up(batch, 8))
    batch_pad = _round_up(batch, block_b)
    grid = (batch_pad // block_b,)

    x_pad = jnp.zeros((batch_pad, d), jnp.float32)
    x_pad = x_pad.at[:batch, :n_input].set(x.astype(jnp.float32))

    w_slab, b_slab = _pack_params(params, d)

    inputs = [x_pad, w_slab, b_slab]
    in_specs = [
        pl.BlockSpec((block_b, d), lambda i: (i, 0)),           # x (tiled)
        pl.BlockSpec((n_layers, d, d), lambda i: (0, 0, 0)),    # weights (resident)
        pl.BlockSpec((n_layers, 1, d), lambda i: (0, 0, 0)),    # biases (resident)
    ]
    if training:
        if key is None:
            key = jax.random.PRNGKey(0)
        bits = jax.random.bits(key, (4, batch_pad, d), dtype=jnp.uint32)
        inputs.append(bits)
        in_specs.append(pl.BlockSpec((4, block_b, d), lambda i: (0, i, 0)))

    kernel = functools.partial(_mlp_kernel, p=p, training=training,
                               n_layers=n_layers)

    out = pl.pallas_call(
        kernel,
        grid=grid,
        in_specs=in_specs,
        out_specs=pl.BlockSpec((block_b, d), lambda i: (i, 0)),
        out_shape=jax.ShapeDtypeStruct((batch_pad, d), jnp.float32),
        compiler_params=pltpu.CompilerParams(
            dimension_semantics=("parallel",)),
    )(*inputs)
    return out[:batch, :n_classes]


def _init_params(key, n_input, n_classes):
    """Deterministic Linear params, pre-transposed to (in, out)."""
    dims = [(n_input, 32), (32, 32), (32, 32), (32, 32), (32, 16),
            (16, 16), (16, 16), (16, 16), (16, 16), (16, n_classes)]
    params = []
    for fan_in, fan_out in dims:
        key, kw, kb = jax.random.split(key, 3)
        bound = 1.0 / np.sqrt(fan_in)
        w = jax.random.uniform(kw, (fan_in, fan_out), jnp.float32, -bound, bound)
        b = jax.random.uniform(kb, (fan_out,), jnp.float32, -bound, bound)
        params.append((w, b))
    return params


def _reference_eval(x, params):
    """Pure-JAX forward with dropout disabled (torch eval mode)."""
    h = x
    for i, (w, b) in enumerate(params):
        h = h @ w + b[None, :]
        if i < len(params) - 1:
            h = jnp.maximum(h, 0.0)
    return h


if __name__ == "__main__":
    key = jax.random.PRNGKey(0)
    n_input, n_classes, batch = 28, 4, 16

    kx, kp, kd = jax.random.split(key, 3)
    x = jax.random.normal(kx, (batch, n_input), jnp.float32)
    params = _init_params(kp, n_input, n_classes)

    ref = np.asarray(_reference_eval(x, params))

    # Eval mode (dropout off) must match the pure-JAX reference.
    out_eval = jax.block_until_ready(
        mlpnet10drop_forward(x, params, training=False))
    np.testing.assert_allclose(np.asarray(out_eval), ref, rtol=1e-5, atol=1e-5)

    # Training path with p=0.0 exercises the dropout code but keeps everything.
    out_p0 = jax.block_until_ready(
        mlpnet10drop_forward(x, params, kd, p=0.0, training=True))
    np.testing.assert_allclose(np.asarray(out_p0), ref, rtol=1e-5, atol=1e-5)

    # Training mode with the module default p=0.5.
    out_train = jax.block_until_ready(
        mlpnet10drop_forward(x, params, kd, p=0.5, training=True))
    assert out_train.shape == (batch, n_classes)
    assert np.isfinite(np.asarray(out_train)).all()

    print("KERNEL_OK")
</pallas_src>

<mosaic_0001>
module attributes {stable_mosaic.version = 11 : i64} {
  func.func @_mlp_kernel(%arg0: i32, %arg1: memref<16x32xf32, #tpu.memory_space<vmem>>, %arg2: memref<10x32x32xf32, #tpu.memory_space<vmem>>, %arg3: memref<10x1x32xf32, #tpu.memory_space<vmem>>, %arg4: memref<16x32xf32, #tpu.memory_space<vmem>>) attributes {dimension_semantics = [#tpu.dimension_semantics<parallel>], iteration_bounds = array<i64: 1>, scalar_prefetch = 0 : i64, scratch_operands = 0 : i64, tpu.core_type = #tpu.core_type<tc>, window_params = [{transform_indices = @transform_0, window_bounds = array<i64: 16, 32>}, {pipeline_mode = #tpu.pipeline_mode<synchronous>, transform_indices = @transform_1, window_bounds = array<i64: 10, 32, 32>}, {pipeline_mode = #tpu.pipeline_mode<synchronous>, transform_indices = @transform_2, window_bounds = array<i64: 10, 1, 32>}, {transform_indices = @transform_3, window_bounds = array<i64: 16, 32>}]} {
    %c0 = arith.constant 0 : index
    %c0_0 = arith.constant 0 : index
    %0 = vector.load %arg1[%c0, %c0_0] : memref<16x32xf32, #tpu.memory_space<vmem>>, vector<16x32xf32>
    %c0_1 = arith.constant 0 : index
    %c0_2 = arith.constant 0 : index
    %c0_3 = arith.constant 0 : index
    %1 = vector.load %arg2[%c0_1, %c0_2, %c0_3] : memref<10x32x32xf32, #tpu.memory_space<vmem>>, vector<1x32x32xf32>
    %2 = vector.shape_cast %1 : vector<1x32x32xf32> to vector<32x32xf32>
    %c0_4 = arith.constant 0 : index
    %c0_5 = arith.constant 0 : index
    %c0_6 = arith.constant 0 : index
    %3 = vector.load %arg3[%c0_4, %c0_5, %c0_6] : memref<10x1x32xf32, #tpu.memory_space<vmem>>, vector<1x1x32xf32>
    %4 = vector.shape_cast %3 : vector<1x1x32xf32> to vector<1x32xf32>
    %cst = arith.constant dense<0.000000e+00> : vector<16x32xf32>
    %5 = tpu.matmul %0, %2, %cst {dimension_numbers = #tpu.dot_dimension_numbers<[1], [0], [0], [1], [0, 0, 1, 1], [], []>} : vector<16x32xf32>, vector<32x32xf32>, vector<16x32xf32> -> vector<16x32xf32>
    %6 = vector.broadcast %4 : vector<1x32xf32> to vector<16x32xf32>
    %7 = arith.addf %5, %6 : vector<16x32xf32>
    %cst_7 = arith.constant 0.000000e+00 : f32
    %8 = vector.broadcast %cst_7 : f32 to vector<16x32xf32>
    %9 = arith.maximumf %7, %8 : vector<16x32xf32>
    %c1 = arith.constant 1 : index
    %c0_8 = arith.constant 0 : index
    %c0_9 = arith.constant 0 : index
    %10 = vector.load %arg2[%c1, %c0_8, %c0_9] : memref<10x32x32xf32, #tpu.memory_space<vmem>>, vector<1x32x32xf32>
    %11 = vector.shape_cast %10 : vector<1x32x32xf32> to vector<32x32xf32>
    %c1_10 = arith.constant 1 : index
    %c0_11 = arith.constant 0 : index
    %c0_12 = arith.constant 0 : index
    %12 = vector.load %arg3[%c1_10, %c0_11, %c0_12] : memref<10x1x32xf32, #tpu.memory_space<vmem>>, vector<1x1x32xf32>
    %13 = vector.shape_cast %12 : vector<1x1x32xf32> to vector<1x32xf32>
    %cst_13 = arith.constant dense<0.000000e+00> : vector<16x32xf32>
    %14 = tpu.matmul %9, %11, %cst_13 {dimension_numbers = #tpu.dot_dimension_numbers<[1], [0], [0], [1], [0, 0, 1, 1], [], []>} : vector<16x32xf32>, vector<32x32xf32>, vector<16x32xf32> -> vector<16x32xf32>
    %15 = vector.broadcast %13 : vector<1x32xf32> to vector<16x32xf32>
    %16 = arith.addf %14, %15 : vector<16x32xf32>
    %cst_14 = arith.constant 0.000000e+00 : f32
    %17 = vector.broadcast %cst_14 : f32 to vector<16x32xf32>
    %18 = arith.maximumf %16, %17 : vector<16x32xf32>
    %c2 = arith.constant 2 : index
    %c0_15 = arith.constant 0 : index
    %c0_16 = arith.constant 0 : index
    %19 = vector.load %arg2[%c2, %c0_15, %c0_16] : memref<10x32x32xf32, #tpu.memory_space<vmem>>, vector<1x32x32xf32>
    %20 = vector.shape_cast %19 : vector<1x32x32xf32> to vector<32x32xf32>
    %c2_17 = arith.constant 2 : index
    %c0_18 = arith.constant 0 : index
    %c0_19 = arith.constant 0 : index
    %21 = vector.load %arg3[%c2_17, %c0_18, %c0_19] : memref<10x1x32xf32, #tpu.memory_space<vmem>>, vector<1x1x32xf32>
    %22 = vector.shape_cast %21 : vector<1x1x32xf32> to vector<1x32xf32>
    %cst_20 = arith.constant dense<0.000000e+00> : vector<16x32xf32>
    %23 = tpu.matmul %18, %20, %cst_20 {dimension_numbers = #tpu.dot_dimension_numbers<[1], [0], [0], [1], [0, 0, 1, 1], [], []>} : vector<16x32xf32>, vector<32x32xf32>, vector<16x32xf32> -> vector<16x32xf32>
    %24 = vector.broadcast %22 : vector<1x32xf32> to vector<16x32xf32>
    %25 = arith.addf %23, %24 : vector<16x32xf32>
    %cst_21 = arith.constant 0.000000e+00 : f32
    %26 = vector.broadcast %cst_21 : f32 to vector<16x32xf32>
    %27 = arith.maximumf %25, %26 : vector<16x32xf32>
    %c3 = arith.constant 3 : index
    %c0_22 = arith.constant 0 : index
    %c0_23 = arith.constant 0 : index
    %28 = vector.load %arg2[%c3, %c0_22, %c0_23] : memref<10x32x32xf32, #tpu.memory_space<vmem>>, vector<1x32x32xf32>
    %29 = vector.shape_cast %28 : vector<1x32x32xf32> to vector<32x32xf32>
    %c3_24 = arith.constant 3 : index
    %c0_25 = arith.constant 0 : index
    %c0_26 = arith.constant 0 : index
    %30 = vector.load %arg3[%c3_24, %c0_25, %c0_26] : memref<10x1x32xf32, #tpu.memory_space<vmem>>, vector<1x1x32xf32>
    %31 = vector.shape_cast %30 : vector<1x1x32xf32> to vector<1x32xf32>
    %cst_27 = arith.constant dense<0.000000e+00> : vector<16x32xf32>
    %32 = tpu.matmul %27, %29, %cst_27 {dimension_numbers = #tpu.dot_dimension_numbers<[1], [0], [0], [1], [0, 0, 1, 1], [], []>} : vector<16x32xf32>, vector<32x32xf32>, vector<16x32xf32> -> vector<16x32xf32>
    %33 = vector.broadcast %31 : vector<1x32xf32> to vector<16x32xf32>
    %34 = arith.addf %32, %33 : vector<16x32xf32>
    %cst_28 = arith.constant 0.000000e+00 : f32
    %35 = vector.broadcast %cst_28 : f32 to vector<16x32xf32>
    %36 = arith.maximumf %34, %35 : vector<16x32xf32>
    %c4 = arith.constant 4 : index
    %c0_29 = arith.constant 0 : index
    %c0_30 = arith.constant 0 : index
    %37 = vector.load %arg2[%c4, %c0_29, %c0_30] : memref<10x32x32xf32, #tpu.memory_space<vmem>>, vector<1x32x32xf32>
    %38 = vector.shape_cast %37 : vector<1x32x32xf32> to vector<32x32xf32>
    %c4_31 = arith.constant 4 : index
    %c0_32 = arith.constant 0 : index
    %c0_33 = arith.constant 0 : index
    %39 = vector.load %arg3[%c4_31, %c0_32, %c0_33] : memref<10x1x32xf32, #tpu.memory_space<vmem>>, vector<1x1x32xf32>
    %40 = vector.shape_cast %39 : vector<1x1x32xf32> to vector<1x32xf32>
    %cst_34 = arith.constant dense<0.000000e+00> : vector<16x32xf32>
    %41 = tpu.matmul %36, %38, %cst_34 {dimension_numbers = #tpu.dot_dimension_numbers<[1], [0], [0], [1], [0, 0, 1, 1], [], []>} : vector<16x32xf32>, vector<32x32xf32>, vector<16x32xf32> -> vector<16x32xf32>
    %42 = vector.broadcast %40 : vector<1x32xf32> to vector<16x32xf32>
    %43 = arith.addf %41, %42 : vector<16x32xf32>
    %cst_35 = arith.constant 0.000000e+00 : f32
    %44 = vector.broadcast %cst_35 : f32 to vector<16x32xf32>
    %45 = arith.maximumf %43, %44 : vector<16x32xf32>
    %c5 = arith.constant 5 : index
    %c0_36 = arith.constant 0 : index
    %c0_37 = arith.constant 0 : index
    %46 = vector.load %arg2[%c5, %c0_36, %c0_37] : memref<10x32x32xf32, #tpu.memory_space<vmem>>, vector<1x32x32xf32>
    %47 = vector.shape_cast %46 : vector<1x32x32xf32> to vector<32x32xf32>
    %c5_38 = arith.constant 5 : index
    %c0_39 = arith.constant 0 : index
    %c0_40 = arith.constant 0 : index
    %48 = vector.load %arg3[%c5_38, %c0_39, %c0_40] : memref<10x1x32xf32, #tpu.memory_space<vmem>>, vector<1x1x32xf32>
    %49 = vector.shape_cast %48 : vector<1x1x32xf32> to vector<1x32xf32>
    %cst_41 = arith.constant dense<0.000000e+00> : vector<16x32xf32>
    %50 = tpu.matmul %45, %47, %cst_41 {dimension_numbers = #tpu.dot_dimension_numbers<[1], [0], [0], [1], [0, 0, 1, 1], [], []>} : vector<16x32xf32>, vector<32x32xf32>, vector<16x32xf32> -> vector<16x32xf32>
    %51 = vector.broadcast %49 : vector<1x32xf32> to vector<16x32xf32>
    %52 = arith.addf %50, %51 : vector<16x32xf32>
    %cst_42 = arith.constant 0.000000e+00 : f32
    %53 = vector.broadcast %cst_42 : f32 to vector<16x32xf32>
    %54 = arith.maximumf %52, %53 : vector<16x32xf32>
    %c6 = arith.constant 6 : index
    %c0_43 = arith.constant 0 : index
    %c0_44 = arith.constant 0 : index
    %55 = vector.load %arg2[%c6, %c0_43, %c0_44] : memref<10x32x32xf32, #tpu.memory_space<vmem>>, vector<1x32x32xf32>
    %56 = vector.shape_cast %55 : vector<1x32x32xf32> to vector<32x32xf32>
    %c6_45 = arith.constant 6 : index
    %c0_46 = arith.constant 0 : index
    %c0_47 = arith.constant 0 : index
    %57 = vector.load %arg3[%c6_45, %c0_46, %c0_47] : memref<10x1x32xf32, #tpu.memory_space<vmem>>, vector<1x1x32xf32>
    %58 = vector.shape_cast %57 : vector<1x1x32xf32> to vector<1x32xf32>
    %cst_48 = arith.constant dense<0.000000e+00> : vector<16x32xf32>
    %59 = tpu.matmul %54, %56, %cst_48 {dimension_numbers = #tpu.dot_dimension_numbers<[1], [0], [0], [1], [0, 0, 1, 1], [], []>} : vector<16x32xf32>, vector<32x32xf32>, vector<16x32xf32> -> vector<16x32xf32>
    %60 = vector.broadcast %58 : vector<1x32xf32> to vector<16x32xf32>
    %61 = arith.addf %59, %60 : vector<16x32xf32>
    %cst_49 = arith.constant 0.000000e+00 : f32
    %62 = vector.broadcast %cst_49 : f32 to vector<16x32xf32>
    %63 = arith.maximumf %61, %62 : vector<16x32xf32>
    %c7 = arith.constant 7 : index
    %c0_50 = arith.constant 0 : index
    %c0_51 = arith.constant 0 : index
    %64 = vector.load %arg2[%c7, %c0_50, %c0_51] : memref<10x32x32xf32, #tpu.memory_space<vmem>>, vector<1x32x32xf32>
    %65 = vector.shape_cast %64 : vector<1x32x32xf32> to vector<32x32xf32>
    %c7_52 = arith.constant 7 : index
    %c0_53 = arith.constant 0 : index
    %c0_54 = arith.constant 0 : index
    %66 = vector.load %arg3[%c7_52, %c0_53, %c0_54] : memref<10x1x32xf32, #tpu.memory_space<vmem>>, vector<1x1x32xf32>
    %67 = vector.shape_cast %66 : vector<1x1x32xf32> to vector<1x32xf32>
    %cst_55 = arith.constant dense<0.000000e+00> : vector<16x32xf32>
    %68 = tpu.matmul %63, %65, %cst_55 {dimension_numbers = #tpu.dot_dimension_numbers<[1], [0], [0], [1], [0, 0, 1, 1], [], []>} : vector<16x32xf32>, vector<32x32xf32>, vector<16x32xf32> -> vector<16x32xf32>
    %69 = vector.broadcast %67 : vector<1x32xf32> to vector<16x32xf32>
    %70 = arith.addf %68, %69 : vector<16x32xf32>
    %cst_56 = arith.constant 0.000000e+00 : f32
    %71 = vector.broadcast %cst_56 : f32 to vector<16x32xf32>
    %72 = arith.maximumf %70, %71 : vector<16x32xf32>
    %c8 = arith.constant 8 : index
    %c0_57 = arith.constant 0 : index
    %c0_58 = arith.constant 0 : index
    %73 = vector.load %arg2[%c8, %c0_57, %c0_58] : memref<10x32x32xf32, #tpu.memory_space<vmem>>, vector<1x32x32xf32>
    %74 = vector.shape_cast %73 : vector<1x32x32xf32> to vector<32x32xf32>
    %c8_59 = arith.constant 8 : index
    %c0_60 = arith.constant 0 : index
    %c0_61 = arith.constant 0 : index
    %75 = vector.load %arg3[%c8_59, %c0_60, %c0_61] : memref<10x1x32xf32, #tpu.memory_space<vmem>>, vector<1x1x32xf32>
    %76 = vector.shape_cast %75 : vector<1x1x32xf32> to vector<1x32xf32>
    %cst_62 = arith.constant dense<0.000000e+00> : vector<16x32xf32>
    %77 = tpu.matmul %72, %74, %cst_62 {dimension_numbers = #tpu.dot_dimension_numbers<[1], [0], [0], [1], [0, 0, 1, 1], [], []>} : vector<16x32xf32>, vector<32x32xf32>, vector<16x32xf32> -> vector<16x32xf32>
    %78 = vector.broadcast %76 : vector<1x32xf32> to vector<16x32xf32>
    %79 = arith.addf %77, %78 : vector<16x32xf32>
    %cst_63 = arith.constant 0.000000e+00 : f32
    %80 = vector.broadcast %cst_63 : f32 to vector<16x32xf32>
    %81 = arith.maximumf %79, %80 : vector<16x32xf32>
    %c9 = arith.constant 9 : index
    %c0_64 = arith.constant 0 : index
    %c0_65 = arith.constant 0 : index
    %82 = vector.load %arg2[%c9, %c0_64, %c0_65] : memref<10x32x32xf32, #tpu.memory_space<vmem>>, vector<1x32x32xf32>
    %83 = vector.shape_cast %82 : vector<1x32x32xf32> to vector<32x32xf32>
    %c9_66 = arith.constant 9 : index
    %c0_67 = arith.constant 0 : index
    %c0_68 = arith.constant 0 : index
    %84 = vector.load %arg3[%c9_66, %c0_67, %c0_68] : memref<10x1x32xf32, #tpu.memory_space<vmem>>, vector<1x1x32xf32>
    %85 = vector.shape_cast %84 : vector<1x1x32xf32> to vector<1x32xf32>
    %cst_69 = arith.constant dense<0.000000e+00> : vector<16x32xf32>
    %86 = tpu.matmul %81, %83, %cst_69 {dimension_numbers = #tpu.dot_dimension_numbers<[1], [0], [0], [1], [0, 0, 1, 1], [], []>} : vector<16x32xf32>, vector<32x32xf32>, vector<16x32xf32> -> vector<16x32xf32>
    %87 = vector.broadcast %85 : vector<1x32xf32> to vector<16x32xf32>
    %88 = arith.addf %86, %87 : vector<16x32xf32>
    %c0_70 = arith.constant 0 : index
    %c0_71 = arith.constant 0 : index
    %89 = vector.load %arg4[%c0_70, %c0_71] : memref<16x32xf32, #tpu.memory_space<vmem>>, vector<16x32xf32>
    tpu.vector_store %arg4[%c0_70, %c0_71], %88 {strides = array<i32>} : memref<16x32xf32, #tpu.memory_space<vmem>>, vector<16x32xf32>,
    return
  }
  func.func @transform_0(%arg0: i32) -> (i32, i32) {
    %c0_i32 = arith.constant 0 : i32
    %c0_i32_0 = arith.constant 0 : i32
    return %arg0, %c0_i32 : i32, i32
  }
  func.func @transform_1(%arg0: i32) -> (i32, i32, i32) {
    %c0_i32 = arith.constant 0 : i32
    %c0_i32_0 = arith.constant 0 : i32
    %c0_i32_1 = arith.constant 0 : i32
    %c0_i32_2 = arith.constant 0 : i32
    return %c0_i32, %c0_i32_0, %c0_i32_1 : i32, i32, i32
  }
  func.func @transform_2(%arg0: i32) -> (i32, i32, i32) {
    %c0_i32 = arith.constant 0 : i32
    %c0_i32_0 = arith.constant 0 : i32
    %c0_i32_1 = arith.constant 0 : i32
    %c0_i32_2 = arith.constant 0 : i32
    return %c0_i32, %c0_i32_0, %c0_i32_1 : i32, i32, i32
  }
  func.func @transform_3(%arg0: i32) -> (i32, i32) {
    %c0_i32 = arith.constant 0 : i32
    %c0_i32_0 = arith.constant 0 : i32
    return %arg0, %c0_i32 : i32, i32
  }
}

</mosaic_0001>

<llo_original>
// kernel: tpu_custom_call.1
$region0: #{tpu_custom_call.1}
  #allocation0 [shape = 'u32[]', space=smem, size = 0x4, offset = 0x4, fixed_abs, tag = 'smem constant byte address 0x4 - core index']
  #allocation1 [shape = 'u32[144,128]{1,0:T(1,128)}', space=vmem, size = 0x12000, scoped, tag = 'internal scratch']
  %s0 = inlined_call_operand.hbm [shape: f32[16,32], index: 0, kind: input, shape index: {}]
  %s1 = inlined_call_operand.hbm [shape: f32[10,32,32], index: 1, kind: input, shape index: {}]
  %s2 = inlined_call_operand.hbm [shape: f32[10,1,32], index: 2, kind: input, shape index: {}]
  %s3 = inlined_call_operand.hbm [shape: f32[16,32], index: 3, kind: output, shape index: {}]
  %s4 = sld [smem:[#allocation0]]
  $region34: #{tpu_custom_call.1} parent=0
    _
  %s6 = ssub.s32 1, %s4
  %s7 = scalar_select 0, %s6, %s4
  $region1: #{tpu_custom_call.1} parent=0
    #allocation2 [shape = 'u8[8192]{0}', space=vmem, size = 0x2000, scoped, tag = 'input window, operand 0, single buffered']
    #allocation3 [shape = 's32[1]{0}', space=sflag, size = 0x4, scoped, tag = 'scoped memory for tpu_custom_call.1']
    #allocation4 [shape = 's32[1]{0}', space=sflag, size = 0x4, scoped, tag = 'scoped memory for tpu_custom_call.1']
    #allocation5 [shape = 'u8[163840]{0}', space=vmem, size = 0x28000, scoped, tag = 'input window, operand 1, single buffered']
    #allocation6 [shape = 's32[1]{0}', space=sflag, size = 0x4, scoped, tag = 'scoped memory for tpu_custom_call.1']
    #allocation7 [shape = 'u8[5120]{0}', space=vmem, size = 0x1400, scoped, tag = 'input window, operand 2, single buffered']
    #allocation8 [shape = 'u8[8192]{0}', space=vmem, size = 0x2000, scoped, tag = 'output window, operand 0, single buffered']
    %8 = vsyncpa [#allocation3], 0
    %9 = vsyncpa [#allocation6], 0
    %10 = vsyncpa [#allocation4], 0
    // Predicated region
    $region2: #{tpu_custom_call.1} parent=1 // pred_check
      _
    $region3: #{tpu_custom_call.1} parent=1 // pred_check_branch
      %12 = sbr.rel (0) target = $region5
    $region4: #{tpu_custom_call.1} parent=1 // pred_region
      %s14 = ssub.s32 256, 256
      %15 = vsyncadd [#allocation3], %s14
      %s16 = sshll.u32 [#allocation2], 4
      %s17 = int_to_ptr.vmem [resolvable:$true] %s16
      %22 = dma.hbm_to_vmem [thread:$0]  %s0, 256, %s17, [#allocation3], 128, 128, 8
    $region5: #{tpu_custom_call.1} parent=1 // pred_fallthru
      _
    // Predicated region
    $region6: #{tpu_custom_call.1} parent=1 // pred_check
      _
    $region7: #{tpu_custom_call.1} parent=1 // pred_check_branch
      %24 = sbr.rel (0) target = $region9
    $region8: #{tpu_custom_call.1} parent=1 // pred_region
      %s26 = ssub.s32 5120, 5120
      %27 = vsyncadd [#allocation6], %s26
      %s28 = sshll.u32 [#allocation5], 4
      %s29 = int_to_ptr.vmem [resolvable:$true] %s28
      %34 = dma.hbm_to_vmem [thread:$0]  %s1, 5120, %s29, [#allocation6], 128, 128, 8
    $region9: #{tpu_custom_call.1} parent=1 // pred_fallthru
      _
    // Predicated region
    $region10: #{tpu_custom_call.1} parent=1 // pred_check
      _
    $region11: #{tpu_custom_call.1} parent=1 // pred_check_branch
      %36 = sbr.rel (0) target = $region13
    $region12: #{tpu_custom_call.1} parent=1 // pred_region
      %s38 = ssub.s32 160, 160
      %39 = vsyncadd [#allocation6], %s38
      %s40 = sshll.u32 [#allocation7], 4
      %s41 = int_to_ptr.vmem [resolvable:$true] %s40
      %46 = dma.hbm_to_vmem [thread:$0]  %s2, 160, %s41, [#allocation6], 16, 16, 1
    $region13: #{tpu_custom_call.1} parent=1 // pred_fallthru
      _
    // Predicated region
    $region14: #{tpu_custom_call.1} parent=1 // pred_check
      _
    $region15: #{tpu_custom_call.1} parent=1 // pred_check_branch
      %48 = sbr.rel (0) target = $region17
    $region16: #{tpu_custom_call.1} parent=1 // pred_region
      %49 = dma.done [#allocation3], 256
    $region17: #{tpu_custom_call.1} parent=1 // pred_fallthru
      _
    // Predicated region
    $region18: #{tpu_custom_call.1} parent=1 // pred_check
      _
    $region19: #{tpu_custom_call.1} parent=1 // pred_check_branch
      %51 = sbr.rel (0) target = $region21
    $region20: #{tpu_custom_call.1} parent=1 // pred_region
      %52 = dma.done [#allocation6], 5120
    $region21: #{tpu_custom_call.1} parent=1 // pred_fallthru
      _
    // Predicated region
    $region22: #{tpu_custom_call.1} parent=1 // pred_check
      _
    $region23: #{tpu_custom_call.1} parent=1 // pred_check_branch
      %54 = sbr.rel (0) target = $region25
    $region24: #{tpu_custom_call.1} parent=1 // pred_region
      %55 = dma.done [#allocation6], 160
    $region25: #{tpu_custom_call.1} parent=1 // pred_fallthru
      _
    %v56 = vld [vmem:[#allocation2] sm:$0xff]
    %v57 = vld [vmem:[#allocation2 + $0x8] sm:$0xff]
    %v58 = vld [vmem:[#allocation5] sm:$0xff]
    %v59 = vld [vmem:[#allocation5 + $0x8] sm:$0xff]
    %v60 = vld [vmem:[#allocation5 + $0x10] sm:$0xff]
    %v61 = vld [vmem:[#allocation5 + $0x18] sm:$0xff]
    %v62 = vld [vmem:[#allocation7] sm:$0x1]
    %v64 = vlaneseq
    %v65 = vshrl.u32 %v64, 7
    %v66 = vsub.s32 0, %v65
    %v67 = vrot.slane %v62, %v66
    %vm69 = vcmask 261120
    %v71 = vsel %vm69, %v56, 0
    %v74 = vsel %vm69, %v57, 0
    %76 = vmatprep.subr.mxu0 0.0
    %77 = vmatpush1.msra.mxu0 0.0
    %78 = vmatprep.subr.mxu0 0.0
    %79 = vmatpush1.msra.mxu0 0.0
    %80 = vmatprep.subr.mxu0 0.0
    %81 = vmatpush1.msra.mxu0 0.0
    %82 = vmatprep.subr.mxu0 0.0
    %83 = vmatpush1.msra.mxu0 0.0
    %84 = vmatprep.subr.mxu0 0.0
    %85 = vmatpush1.msra.mxu0 0.0
    %86 = vmatprep.subr.mxu0 0.0
    %87 = vmatpush1.msra.mxu0 0.0
    %88 = vmatprep.subr.mxu0 0.0
    %89 = vmatpush1.msra.mxu0 0.0
    %90 = vmatprep.subr.mxu0 0.0
    %91 = vmatpush1.msra.mxu0 0.0
    %92 = vmatprep.subr.mxu0 0.0
    %93 = vmatpush1.msra.mxu0 0.0
    %94 = vmatprep.subr.mxu0 0.0
    %95 = vmatpush1.msra.mxu0 0.0
    %96 = vmatprep.subr.mxu0 0.0
    %97 = vmatpush1.msra.mxu0 0.0
    %98 = vmatprep.subr.mxu0 0.0
    %99 = vmatpush1.msra.mxu0 0.0
    %100 = vmatprep.subr.mxu0 0.0
    %101 = vmatpush1.msra.mxu0 %v61
    %102 = vmatprep.subr.mxu0 0.0
    %103 = vmatpush1.msra.mxu0 %v60
    %104 = vmatprep.subr.mxu0 0.0
    %105 = vmatpush1.msra.mxu0 %v59
    %106 = vmatprep.subr.mxu0 0.0
    %107 = vmatpush1.msra.mxu0 %v58
    %108 = vmatprep.subr.mxu0 0.0
    %109 = vmatpush2.msra.mxu0 0.0
    %110 = vmatprep.subr.mxu0 0.0
    %111 = vmatpush2.msra.mxu0 0.0
    %112 = vmatprep.subr.mxu0 0.0
    %113 = vmatpush2.msra.mxu0 0.0
    %114 = vmatprep.subr.mxu0 0.0
    %115 = vmatpush2.msra.mxu0 0.0
    %116 = vmatprep.subr.mxu0 0.0
    %117 = vmatpush2.msra.mxu0 0.0
    %118 = vmatprep.subr.mxu0 0.0
    %119 = vmatpush2.msra.mxu0 0.0
    %120 = vmatprep.subr.mxu0 0.0
    %121 = vmatpush2.msra.mxu0 0.0
    %122 = vmatprep.subr.mxu0 0.0
    %123 = vmatpush2.msra.mxu0 0.0
    %124 = vmatprep.subr.mxu0 0.0
    %125 = vmatpush2.msra.mxu0 0.0
    %126 = vmatprep.subr.mxu0 0.0
    %127 = vmatpush2.msra.mxu0 0.0
    %128 = vmatprep.subr.mxu0 0.0
    %129 = vmatpush2.msra.mxu0 0.0
    %130 = vmatprep.subr.mxu0 0.0
    %131 = vmatpush2.msra.mxu0 0.0
    %132 = vmatprep.subr.mxu0 0.0
    %133 = vmatpush2.msra.mxu0 0.0
    %134 = vmatprep.subr.mxu0 0.0
    %135 = vmatpush2.msra.mxu0 0.0
    %136 = vmatprep.subr.mxu0 0.0
    %137 = vmatpush2.msra.mxu0 0.0
    %138 = vmatprep.subr.mxu0 0.0
    %139 = vmatpush2.msra.mxu0 0.0
    %140 = vmatprep.mubr.f32.mxu0 0.0
    %141 = vmatmul.mubr.f32.gmra.mxu0 %v71
    %v142 = vpop.f32.mrf.mxu0
    %v143 = vadd.f32 %v67, %v142
    %v144 = vpop.f32.mrf.mxu0
    %145 = vmatprep.mubr.f32.mxu0 0.0
    %146 = vmatmul.mubr.f32.gmra.mxu0 %v74
    %v147 = vpop.f32.mrf.mxu0
    %v148 = vadd.f32 %v67, %v147
    %v149 = vpop.f32.mrf.mxu0
    %150 = vdwg.mxu0
    %v151 = vmax.f32 %v143, 0.0
    %v152 = vmax.f32 %v148, 0.0
    %s153 = scalar_lea.vmem [#allocation5], 32
    %v154 = vld [vmem:[%s153] sm:$0xff]
    %v155 = vld [vmem:[%s153 + $0x8] sm:$0xff]
    %v156 = vld [vmem:[%s153 + $0x10] sm:$0xff]
    %v157 = vld [vmem:[%s153 + $0x18] sm:$0xff]
    %s158 = scalar_lea.vmem [#allocation7], 1
    %v159 = vld [vmem:[%s158] sm:$0x1]
    %v161 = vlaneseq
    %v162 = vshrl.u32 %v161, 7
    %v163 = vsub.s32 0, %v162
    %v164 = vrot.slane %v159, %v163
    %v167 = vsel %vm69, %v151, 0
    %v170 = vsel %vm69, %v152, 0
    %172 = vmatprep.subr.mxu0 0.0
    %173 = vmatpush1.msra.mxu0 0.0
    %174 = vmatprep.subr.mxu0 0.0
    %175 = vmatpush1.msra.mxu0 0.0
    %176 = vmatprep.subr.mxu0 0.0
    %177 = vmatpush1.msra.mxu0 0.0
    %178 = vmatprep.subr.mxu0 0.0
    %179 = vmatpush1.msra.mxu0 0.0
    %180 = vmatprep.subr.mxu0 0.0
    %181 = vmatpush1.msra.mxu0 0.0
    %182 = vmatprep.subr.mxu0 0.0
    %183 = vmatpush1.msra.mxu0 0.0
    %184 = vmatprep.subr.mxu0 0.0
    %185 = vmatpush1.msra.mxu0 0.0
    %186 = vmatprep.subr.mxu0 0.0
    %187 = vmatpush1.msra.mxu0 0.0
    %188 = vmatprep.subr.mxu0 0.0
    %189 = vmatpush1.msra.mxu0 0.0
    %190 = vmatprep.subr.mxu0 0.0
    %191 = vmatpush1.msra.mxu0 0.0
    %192 = vmatprep.subr.mxu0 0.0
    %193 = vmatpush1.msra.mxu0 0.0
    %194 = vmatprep.subr.mxu0 0.0
    %195 = vmatpush1.msra.mxu0 0.0
    %196 = vmatprep.subr.mxu0 0.0
    %197 = vmatpush1.msra.mxu0 %v157
    %198 = vmatprep.subr.mxu0 0.0
    %199 = vmatpush1.msra.mxu0 %v156
    %200 = vmatprep.subr.mxu0 0.0
    %201 = vmatpush1.msra.mxu0 %v155
    %202 = vmatprep.subr.mxu0 0.0
    %203 = vmatpush1.msra.mxu0 %v154
    %204 = vmatprep.subr.mxu0 0.0
    %205 = vmatpush2.msra.mxu0 0.0
    %206 = vmatprep.subr.mxu0 0.0
    %207 = vmatpush2.msra.mxu0 0.0
    %208 = vmatprep.subr.mxu0 0.0
    %209 = vmatpush2.msra.mxu0 0.0
    %210 = vmatprep.subr.mxu0 0.0
    %211 = vmatpush2.msra.mxu0 0.0
    %212 = vmatprep.subr.mxu0 0.0
    %213 = vmatpush2.msra.mxu0 0.0
    %214 = vmatprep.subr.mxu0 0.0
    %215 = vmatpush2.msra.mxu0 0.0
    %216 = vmatprep.subr.mxu0 0.0
    %217 = vmatpush2.msra.mxu0 0.0
    %218 = vmatprep.subr.mxu0 0.0
    %219 = vmatpush2.msra.mxu0 0.0
    %220 = vmatprep.subr.mxu0 0.0
    %221 = vmatpush2.msra.mxu0 0.0
    %222 = vmatprep.subr.mxu0 0.0
    %223 = vmatpush2.msra.mxu0 0.0
    %224 = vmatprep.subr.mxu0 0.0
    %225 = vmatpush2.msra.mxu0 0.0
    %226 = vmatprep.subr.mxu0 0.0
    %227 = vmatpush2.msra.mxu0 0.0
    %228 = vmatprep.subr.mxu0 0.0
    %229 = vmatpush2.msra.mxu0 0.0
    %230 = vmatprep.subr.mxu0 0.0
    %231 = vmatpush2.msra.mxu0 0.0
    %232 = vmatprep.subr.mxu0 0.0
    %233 = vmatpush2.msra.mxu0 0.0
    %234 = vmatprep.subr.mxu0 0.0
    %235 = vmatpush2.msra.mxu0 0.0
    %236 = vmatprep.mubr.f32.mxu0 0.0
    %237 = vmatmul.mubr.f32.gmra.mxu0 %v167
    %v238 = vpop.f32.mrf.mxu0
    %v239 = vadd.f32 %v164, %v238
    %v240 = vpop.f32.mrf.mxu0
    %241 = vmatprep.mubr.f32.mxu0 0.0
    %242 = vmatmul.mubr.f32.gmra.mxu0 %v170
    %v243 = vpop.f32.mrf.mxu0
    %v244 = vadd.f32 %v164, %v243
    %v245 = vpop.f32.mrf.mxu0
    %246 = vdwg.mxu0
    %v247 = vmax.f32 %v239, 0.0
    %v248 = vmax.f32 %v244, 0.0
    %s249 = scalar_lea.vmem [#allocation5], 64
    %v250 = vld [vmem:[%s249] sm:$0xff]
    %v251 = vld [vmem:[%s249 + $0x8] sm:$0xff]
    %v252 = vld [vmem:[%s249 + $0x10] sm:$0xff]
    %v253 = vld [vmem:[%s249 + $0x18] sm:$0xff]
    %s254 = scalar_lea.vmem [#allocation7], 2
    %v255 = vld [vmem:[%s254] sm:$0x1]
    %v257 = vlaneseq
    %v258 = vshrl.u32 %v257, 7
    %v259 = vsub.s32 0, %v258
    %v260 = vrot.slane %v255, %v259
    %v263 = vsel %vm69, %v247, 0
    %v266 = vsel %vm69, %v248, 0
    %268 = vmatprep.subr.mxu0 0.0
    %269 = vmatpush1.msra.mxu0 0.0
    %270 = vmatprep.subr.mxu0 0.0
    %271 = vmatpush1.msra.mxu0 0.0
    %272 = vmatprep.subr.mxu0 0.0
    %273 = vmatpush1.msra.mxu0 0.0
    %274 = vmatprep.subr.mxu0 0.0
    %275 = vmatpush1.msra.mxu0 0.0
    %276 = vmatprep.subr.mxu0 0.0
    %277 = vmatpush1.msra.mxu0 0.0
    %278 = vmatprep.subr.mxu0 0.0
    %279 = vmatpush1.msra.mxu0 0.0
    %280 = vmatprep.subr.mxu0 0.0
    %281 = vmatpush1.msra.mxu0 0.0
    %282 = vmatprep.subr.mxu0 0.0
    %283 = vmatpush1.msra.mxu0 0.0
    %284 = vmatprep.subr.mxu0 0.0
    %285 = vmatpush1.msra.mxu0 0.0
    %286 = vmatprep.subr.mxu0 0.0
    %287 = vmatpush1.msra.mxu0 0.0
    %288 = vmatprep.subr.mxu0 0.0
    %289 = vmatpush1.msra.mxu0 0.0
    %290 = vmatprep.subr.mxu0 0.0
    %291 = vmatpush1.msra.mxu0 0.0
    %292 = vmatprep.subr.mxu0 0.0
    %293 = vmatpush1.msra.mxu0 %v253
    %294 = vmatprep.subr.mxu0 0.0
    %295 = vmatpush1.msra.mxu0 %v252
    %296 = vmatprep.subr.mxu0 0.0
    %297 = vmatpush1.msra.mxu0 %v251
    %298 = vmatprep.subr.mxu0 0.0
    %299 = vmatpush1.msra.mxu0 %v250
    %300 = vmatprep.subr.mxu0 0.0
    %301 = vmatpush2.msra.mxu0 0.0
    %302 = vmatprep.subr.mxu0 0.0
    %303 = vmatpush2.msra.mxu0 0.0
    %304 = vmatprep.subr.mxu0 0.0
    %305 = vmatpush2.msra.mxu0 0.0
    %306 = vmatprep.subr.mxu0 0.0
    %307 = vmatpush2.msra.mxu0 0.0
    %308 = vmatprep.subr.mxu0 0.0
    %309 = vmatpush2.msra.mxu0 0.0
    %310 = vmatprep.subr.mxu0 0.0
    %311 = vmatpush2.msra.mxu0 0.0
    %312 = vmatprep.subr.mxu0 0.0
    %313 = vmatpush2.msra.mxu0 0.0
    %314 = vmatprep.subr.mxu0 0.0
    %315 = vmatpush2.msra.mxu0 0.0
    %316 = vmatprep.subr.mxu0 0.0
    %317 = vmatpush2.msra.mxu0 0.0
    %318 = vmatprep.subr.mxu0 0.0
    %319 = vmatpush2.msra.mxu0 0.0
    %320 = vmatprep.subr.mxu0 0.0
    %321 = vmatpush2.msra.mxu0 0.0
    %322 = vmatprep.subr.mxu0 0.0
    %323 = vmatpush2.msra.mxu0 0.0
    %324 = vmatprep.subr.mxu0 0.0
    %325 = vmatpush2.msra.mxu0 0.0
    %326 = vmatprep.subr.mxu0 0.0
    %327 = vmatpush2.msra.mxu0 0.0
    %328 = vmatprep.subr.mxu0 0.0
    %329 = vmatpush2.msra.mxu0 0.0
    %330 = vmatprep.subr.mxu0 0.0
    %331 = vmatpush2.msra.mxu0 0.0
    %332 = vmatprep.mubr.f32.mxu0 0.0
    %333 = vmatmul.mubr.f32.gmra.mxu0 %v263
    %v334 = vpop.f32.mrf.mxu0
    %v335 = vadd.f32 %v260, %v334
    %v336 = vpop.f32.mrf.mxu0
    %337 = vmatprep.mubr.f32.mxu0 0.0
    %338 = vmatmul.mubr.f32.gmra.mxu0 %v266
    %v339 = vpop.f32.mrf.mxu0
    %v340 = vadd.f32 %v260, %v339
    %v341 = vpop.f32.mrf.mxu0
    %342 = vdwg.mxu0
    %v343 = vmax.f32 %v335, 0.0
    %v344 = vmax.f32 %v340, 0.0
    %s345 = scalar_lea.vmem [#allocation5], 96
    %v346 = vld [vmem:[%s345] sm:$0xff]
    %v347 = vld [vmem:[%s345 + $0x8] sm:$0xff]
    %v348 = vld [vmem:[%s345 + $0x10] sm:$0xff]
    %v349 = vld [vmem:[%s345 + $0x18] sm:$0xff]
    %s350 = scalar_lea.vmem [#allocation7], 3
    %v351 = vld [vmem:[%s350] sm:$0x1]
    %v353 = vlaneseq
    %v354 = vshrl.u32 %v353, 7
    %v355 = vsub.s32 0, %v354
    %v356 = vrot.slane %v351, %v355
    %v359 = vsel %vm69, %v343, 0
    %v362 = vsel %vm69, %v344, 0
    %364 = vmatprep.subr.mxu0 0.0
    %365 = vmatpush1.msra.mxu0 0.0
    %366 = vmatprep.subr.mxu0 0.0
    %367 = vmatpush1.msra.mxu0 0.0
    %368 = vmatprep.subr.mxu0 0.0
    %369 = vmatpush1.msra.mxu0 0.0
    %370 = vmatprep.subr.mxu0 0.0
    %371 = vmatpush1.msra.mxu0 0.0
    %372 = vmatprep.subr.mxu0 0.0
    %373 = vmatpush1.msra.mxu0 0.0
    %374 = vmatprep.subr.mxu0 0.0
    %375 = vmatpush1.msra.mxu0 0.0
    %376 = vmatprep.subr.mxu0 0.0
    %377 = vmatpush1.msra.mxu0 0.0
    %378 = vmatprep.subr.mxu0 0.0
    %379 = vmatpush1.msra.mxu0 0.0
    %380 = vmatprep.subr.mxu0 0.0
    %381 = vmatpush1.msra.mxu0 0.0
    %382 = vmatprep.subr.mxu0 0.0
    %383 = vmatpush1.msra.mxu0 0.0
    %384 = vmatprep.subr.mxu0 0.0
    %385 = vmatpush1.msra.mxu0 0.0
    %386 = vmatprep.subr.mxu0 0.0
    %387 = vmatpush1.msra.mxu0 0.0
    %388 = vmatprep.subr.mxu0 0.0
    %389 = vmatpush1.msra.mxu0 %v349
    %390 = vmatprep.subr.mxu0 0.0
    %391 = vmatpush1.msra.mxu0 %v348
    %392 = vmatprep.subr.mxu0 0.0
    %393 = vmatpush1.msra.mxu0 %v347
    %394 = vmatprep.subr.mxu0 0.0
    %395 = vmatpush1.msra.mxu0 %v346
    %396 = vmatprep.subr.mxu0 0.0
    %397 = vmatpush2.msra.mxu0 0.0
    %398 = vmatprep.subr.mxu0 0.0
    %399 = vmatpush2.msra.mxu0 0.0
    %400 = vmatprep.subr.mxu0 0.0
    %401 = vmatpush2.msra.mxu0 0.0
    %402 = vmatprep.subr.mxu0 0.0
    %403 = vmatpush2.msra.mxu0 0.0
    %404 = vmatprep.subr.mxu0 0.0
    %405 = vmatpush2.msra.mxu0 0.0
    %406 = vmatprep.subr.mxu0 0.0
    %407 = vmatpush2.msra.mxu0 0.0
    %408 = vmatprep.subr.mxu0 0.0
    %409 = vmatpush2.msra.mxu0 0.0
    %410 = vmatprep.subr.mxu0 0.0
    %411 = vmatpush2.msra.mxu0 0.0
    %412 = vmatprep.subr.mxu0 0.0
    %413 = vmatpush2.msra.mxu0 0.0
    %414 = vmatprep.subr.mxu0 0.0
    %415 = vmatpush2.msra.mxu0 0.0
    %416 = vmatprep.subr.mxu0 0.0
    %417 = vmatpush2.msra.mxu0 0.0
    %418 = vmatprep.subr.mxu0 0.0
    %419 = vmatpush2.msra.mxu0 0.0
    %420 = vmatprep.subr.mxu0 0.0
    %421 = vmatpush2.msra.mxu0 0.0
    %422 = vmatprep.subr.mxu0 0.0
    %423 = vmatpush2.msra.mxu0 0.0
    %424 = vmatprep.subr.mxu0 0.0
    %425 = vmatpush2.msra.mxu0 0.0
    %426 = vmatprep.subr.mxu0 0.0
    %427 = vmatpush2.msra.mxu0 0.0
    %428 = vmatprep.mubr.f32.mxu0 0.0
    %429 = vmatmul.mubr.f32.gmra.mxu0 %v359
    %v430 = vpop.f32.mrf.mxu0
    %v431 = vadd.f32 %v356, %v430
    %v432 = vpop.f32.mrf.mxu0
    %433 = vmatprep.mubr.f32.mxu0 0.0
    %434 = vmatmul.mubr.f32.gmra.mxu0 %v362
    %v435 = vpop.f32.mrf.mxu0
    %v436 = vadd.f32 %v356, %v435
    %v437 = vpop.f32.mrf.mxu0
    %438 = vdwg.mxu0
    %v439 = vmax.f32 %v431, 0.0
    %v440 = vmax.f32 %v436, 0.0
    %s441 = scalar_lea.vmem [#allocation5], 128
    %v442 = vld [vmem:[%s441] sm:$0xff]
    %v443 = vld [vmem:[%s441 + $0x8] sm:$0xff]
    %v444 = vld [vmem:[%s441 + $0x10] sm:$0xff]
    %v445 = vld [vmem:[%s441 + $0x18] sm:$0xff]
    %s446 = scalar_lea.vmem [#allocation7], 4
    %v447 = vld [vmem:[%s446] sm:$0x1]
    %v449 = vlaneseq
    %v450 = vshrl.u32 %v449, 7
    %v451 = vsub.s32 0, %v450
    %v452 = vrot.slane %v447, %v451
    %v455 = vsel %vm69, %v439, 0
    %v458 = vsel %vm69, %v440, 0
    %460 = vmatprep.subr.mxu0 0.0
    %461 = vmatpush1.msra.mxu0 0.0
    %462 = vmatprep.subr.mxu0 0.0
    %463 = vmatpush1.msra.mxu0 0.0
    %464 = vmatprep.subr.mxu0 0.0
    %465 = vmatpush1.msra.mxu0 0.0
    %466 = vmatprep.subr.mxu0 0.0
    %467 = vmatpush1.msra.mxu0 0.0
    %468 = vmatprep.subr.mxu0 0.0
    %469 = vmatpush1.msra.mxu0 0.0
    %470 = vmatprep.subr.mxu0 0.0
    %471 = vmatpush1.msra.mxu0 0.0
    %472 = vmatprep.subr.mxu0 0.0
    %473 = vmatpush1.msra.mxu0 0.0
    %474 = vmatprep.subr.mxu0 0.0
    %475 = vmatpush1.msra.mxu0 0.0
    %476 = vmatprep.subr.mxu0 0.0
    %477 = vmatpush1.msra.mxu0 0.0
    %478 = vmatprep.subr.mxu0 0.0
    %479 = vmatpush1.msra.mxu0 0.0
    %480 = vmatprep.subr.mxu0 0.0
    %481 = vmatpush1.msra.mxu0 0.0
    %482 = vmatprep.subr.mxu0 0.0
    %483 = vmatpush1.msra.mxu0 0.0
    %484 = vmatprep.subr.mxu0 0.0
    %485 = vmatpush1.msra.mxu0 %v445
    %486 = vmatprep.subr.mxu0 0.0
    %487 = vmatpush1.msra.mxu0 %v444
    %488 = vmatprep.subr.mxu0 0.0
    %489 = vmatpush1.msra.mxu0 %v443
    %490 = vmatprep.subr.mxu0 0.0
    %491 = vmatpush1.msra.mxu0 %v442
    %492 = vmatprep.subr.mxu0 0.0
    %493 = vmatpush2.msra.mxu0 0.0
    %494 = vmatprep.subr.mxu0 0.0
    %495 = vmatpush2.msra.mxu0 0.0
    %496 = vmatprep.subr.mxu0 0.0
    %497 = vmatpush2.msra.mxu0 0.0
    %498 = vmatprep.subr.mxu0 0.0
    %499 = vmatpush2.msra.mxu0 0.0
    %500 = vmatprep.subr.mxu0 0.0
    %501 = vmatpush2.msra.mxu0 0.0
    %502 = vmatprep.subr.mxu0 0.0
    %503 = vmatpush2.msra.mxu0 0.0
    %504 = vmatprep.subr.mxu0 0.0
    %505 = vmatpush2.msra.mxu0 0.0
    %506 = vmatprep.subr.mxu0 0.0
    %507 = vmatpush2.msra.mxu0 0.0
    %508 = vmatprep.subr.mxu0 0.0
    %509 = vmatpush2.msra.mxu0 0.0
    %510 = vmatprep.subr.mxu0 0.0
    %511 = vmatpush2.msra.mxu0 0.0
    %512 = vmatprep.subr.mxu0 0.0
    %513 = vmatpush2.msra.mxu0 0.0
    %514 = vmatprep.subr.mxu0 0.0
    %515 = vmatpush2.msra.mxu0 0.0
    %516 = vmatprep.subr.mxu0 0.0
    %517 = vmatpush2.msra.mxu0 0.0
    %518 = vmatprep.subr.mxu0 0.0
    %519 = vmatpush2.msra.mxu0 0.0
    %520 = vmatprep.subr.mxu0 0.0
    %521 = vmatpush2.msra.mxu0 0.0
    %522 = vmatprep.subr.mxu0 0.0
    %523 = vmatpush2.msra.mxu0 0.0
    %524 = vmatprep.mubr.f32.mxu0 0.0
    %525 = vmatmul.mubr.f32.gmra.mxu0 %v455
    %v526 = vpop.f32.mrf.mxu0
    %v527 = vadd.f32 %v452, %v526
    %v528 = vpop.f32.mrf.mxu0
    %529 = vmatprep.mubr.f32.mxu0 0.0
    %530 = vmatmul.mubr.f32.gmra.mxu0 %v458
    %v531 = vpop.f32.mrf.mxu0
    %v532 = vadd.f32 %v452, %v531
    %v533 = vpop.f32.mrf.mxu0
    %534 = vdwg.mxu0
    %v535 = vmax.f32 %v527, 0.0
    %v536 = vmax.f32 %v532, 0.0
    %s537 = scalar_lea.vmem [#allocation5], 160
    %v538 = vld [vmem:[%s537] sm:$0xff]
    %v539 = vld [vmem:[%s537 + $0x8] sm:$0xff]
    %v540 = vld [vmem:[%s537 + $0x10] sm:$0xff]
    %v541 = vld [vmem:[%s537 + $0x18] sm:$0xff]
    %s542 = scalar_lea.vmem [#allocation7], 5
    %v543 = vld [vmem:[%s542] sm:$0x1]
    %v545 = vlaneseq
    %v546 = vshrl.u32 %v545, 7
    %v547 = vsub.s32 0, %v546
    %v548 = vrot.slane %v543, %v547
    %v551 = vsel %vm69, %v535, 0
    %v554 = vsel %vm69, %v536, 0
    %556 = vmatprep.subr.mxu0 0.0
    %557 = vmatpush1.msra.mxu0 0.0
    %558 = vmatprep.subr.mxu0 0.0
    %559 = vmatpush1.msra.mxu0 0.0
    %560 = vmatprep.subr.mxu0 0.0
    %561 = vmatpush1.msra.mxu0 0.0
    %562 = vmatprep.subr.mxu0 0.0
    %563 = vmatpush1.msra.mxu0 0.0
    %564 = vmatprep.subr.mxu0 0.0
    %565 = vmatpush1.msra.mxu0 0.0
    %566 = vmatprep.subr.mxu0 0.0
    %567 = vmatpush1.msra.mxu0 0.0
    %568 = vmatprep.subr.mxu0 0.0
    %569 = vmatpush1.msra.mxu0 0.0
    %570 = vmatprep.subr.mxu0 0.0
    %571 = vmatpush1.msra.mxu0 0.0
    %572 = vmatprep.subr.mxu0 0.0
    %573 = vmatpush1.msra.mxu0 0.0
    %574 = vmatprep.subr.mxu0 0.0
    %575 = vmatpush1.msra.mxu0 0.0
    %576 = vmatprep.subr.mxu0 0.0
    %577 = vmatpush1.msra.mxu0 0.0
    %578 = vmatprep.subr.mxu0 0.0
    %579 = vmatpush1.msra.mxu0 0.0
    %580 = vmatprep.subr.mxu0 0.0
    %581 = vmatpush1.msra.mxu0 %v541
    %582 = vmatprep.subr.mxu0 0.0
    %583 = vmatpush1.msra.mxu0 %v540
    %584 = vmatprep.subr.mxu0 0.0
    %585 = vmatpush1.msra.mxu0 %v539
    %586 = vmatprep.subr.mxu0 0.0
    %587 = vmatpush1.msra.mxu0 %v538
    %588 = vmatprep.subr.mxu0 0.0
    %589 = vmatpush2.msra.mxu0 0.0
    %590 = vmatprep.subr.mxu0 0.0
    %591 = vmatpush2.msra.mxu0 0.0
    %592 = vmatprep.subr.mxu0 0.0
    %593 = vmatpush2.msra.mxu0 0.0
    %594 = vmatprep.subr.mxu0 0.0
    %595 = vmatpush2.msra.mxu0 0.0
    %596 = vmatprep.subr.mxu0 0.0
    %597 = vmatpush2.msra.mxu0 0.0
    %598 = vmatprep.subr.mxu0 0.0
    %599 = vmatpush2.msra.mxu0 0.0
    %600 = vmatprep.subr.mxu0 0.0
    %601 = vmatpush2.msra.mxu0 0.0
    %602 = vmatprep.subr.mxu0 0.0
    %603 = vmatpush2.msra.mxu0 0.0
    %604 = vmatprep.subr.mxu0 0.0
    %605 = vmatpush2.msra.mxu0 0.0
    %606 = vmatprep.subr.mxu0 0.0
    %607 = vmatpush2.msra.mxu0 0.0
    %608 = vmatprep.subr.mxu0 0.0
    %609 = vmatpush2.msra.mxu0 0.0
    %610 = vmatprep.subr.mxu0 0.0
    %611 = vmatpush2.msra.mxu0 0.0
    %612 = vmatprep.subr.mxu0 0.0
    %613 = vmatpush2.msra.mxu0 0.0
    %614 = vmatprep.subr.mxu0 0.0
    %615 = vmatpush2.msra.mxu0 0.0
    %616 = vmatprep.subr.mxu0 0.0
    %617 = vmatpush2.msra.mxu0 0.0
    %618 = vmatprep.subr.mxu0 0.0
    %619 = vmatpush2.msra.mxu0 0.0
    %620 = vmatprep.mubr.f32.mxu0 0.0
    %621 = vmatmul.mubr.f32.gmra.mxu0 %v551
    %v622 = vpop.f32.mrf.mxu0
    %v623 = vadd.f32 %v548, %v622
    %v624 = vpop.f32.mrf.mxu0
    %625 = vmatprep.mubr.f32.mxu0 0.0
    %626 = vmatmul.mubr.f32.gmra.mxu0 %v554
    %v627 = vpop.f32.mrf.mxu0
    %v628 = vadd.f32 %v548, %v627
    %v629 = vpop.f32.mrf.mxu0
    %630 = vdwg.mxu0
    %v631 = vmax.f32 %v623, 0.0
    %v632 = vmax.f32 %v628, 0.0
    %s633 = scalar_lea.vmem [#allocation5], 192
    %v634 = vld [vmem:[%s633] sm:$0xff]
    %v635 = vld [vmem:[%s633 + $0x8] sm:$0xff]
    %v636 = vld [vmem:[%s633 + $0x10] sm:$0xff]
    %v637 = vld [vmem:[%s633 + $0x18] sm:$0xff]
    %s638 = scalar_lea.vmem [#allocation7], 6
    %v639 = vld [vmem:[%s638] sm:$0x1]
    %v641 = vlaneseq
    %v642 = vshrl.u32 %v641, 7
    %v643 = vsub.s32 0, %v642
    %v644 = vrot.slane %v639, %v643
    %v647 = vsel %vm69, %v631, 0
    %v650 = vsel %vm69, %v632, 0
    %652 = vmatprep.subr.mxu0 0.0
    %653 = vmatpush1.msra.mxu0 0.0
    %654 = vmatprep.subr.mxu0 0.0
    %655 = vmatpush1.msra.mxu0 0.0
    %656 = vmatprep.subr.mxu0 0.0
    %657 = vmatpush1.msra.mxu0 0.0
    %658 = vmatprep.subr.mxu0 0.0
    %659 = vmatpush1.msra.mxu0 0.0
    %660 = vmatprep.subr.mxu0 0.0
    %661 = vmatpush1.msra.mxu0 0.0
    %662 = vmatprep.subr.mxu0 0.0
    %663 = vmatpush1.msra.mxu0 0.0
    %664 = vmatprep.subr.mxu0 0.0
    %665 = vmatpush1.msra.mxu0 0.0
    %666 = vmatprep.subr.mxu0 0.0
    %667 = vmatpush1.msra.mxu0 0.0
    %668 = vmatprep.subr.mxu0 0.0
    %669 = vmatpush1.msra.mxu0 0.0
    %670 = vmatprep.subr.mxu0 0.0
    %671 = vmatpush1.msra.mxu0 0.0
    %672 = vmatprep.subr.mxu0 0.0
    %673 = vmatpush1.msra.mxu0 0.0
    %674 = vmatprep.subr.mxu0 0.0
    %675 = vmatpush1.msra.mxu0 0.0
    %676 = vmatprep.subr.mxu0 0.0
    %677 = vmatpush1.msra.mxu0 %v637
    %678 = vmatprep.subr.mxu0 0.0
    %679 = vmatpush1.msra.mxu0 %v636
    %680 = vmatprep.subr.mxu0 0.0
    %681 = vmatpush1.msra.mxu0 %v635
    %682 = vmatprep.subr.mxu0 0.0
    %683 = vmatpush1.msra.mxu0 %v634
    %684 = vmatprep.subr.mxu0 0.0
    %685 = vmatpush2.msra.mxu0 0.0
    %686 = vmatprep.subr.mxu0 0.0
    %687 = vmatpush2.msra.mxu0 0.0
    %688 = vmatprep.subr.mxu0 0.0
    %689 = vmatpush2.msra.mxu0 0.0
    %690 = vmatprep.subr.mxu0 0.0
    %691 = vmatpush2.msra.mxu0 0.0
    %692 = vmatprep.subr.mxu0 0.0
    %693 = vmatpush2.msra.mxu0 0.0
    %694 = vmatprep.subr.mxu0 0.0
    %695 = vmatpush2.msra.mxu0 0.0
    %696 = vmatprep.subr.mxu0 0.0
    %697 = vmatpush2.msra.mxu0 0.0
    %698 = vmatprep.subr.mxu0 0.0
    %699 = vmatpush2.msra.mxu0 0.0
    %700 = vmatprep.subr.mxu0 0.0
    %701 = vmatpush2.msra.mxu0 0.0
    %702 = vmatprep.subr.mxu0 0.0
    %703 = vmatpush2.msra.mxu0 0.0
    %704 = vmatprep.subr.mxu0 0.0
    %705 = vmatpush2.msra.mxu0 0.0
    %706 = vmatprep.subr.mxu0 0.0
    %707 = vmatpush2.msra.mxu0 0.0
    %708 = vmatprep.subr.mxu0 0.0
    %709 = vmatpush2.msra.mxu0 0.0
    %710 = vmatprep.subr.mxu0 0.0
    %711 = vmatpush2.msra.mxu0 0.0
    %712 = vmatprep.subr.mxu0 0.0
    %713 = vmatpush2.msra.mxu0 0.0
    %714 = vmatprep.subr.mxu0 0.0
    %715 = vmatpush2.msra.mxu0 0.0
    %716 = vmatprep.mubr.f32.mxu0 0.0
    %717 = vmatmul.mubr.f32.gmra.mxu0 %v647
    %v718 = vpop.f32.mrf.mxu0
    %v719 = vadd.f32 %v644, %v718
    %v720 = vpop.f32.mrf.mxu0
    %721 = vmatprep.mubr.f32.mxu0 0.0
    %722 = vmatmul.mubr.f32.gmra.mxu0 %v650
    %v723 = vpop.f32.mrf.mxu0
    %v724 = vadd.f32 %v644, %v723
    %v725 = vpop.f32.mrf.mxu0
    %726 = vdwg.mxu0
    %v727 = vmax.f32 %v719, 0.0
    %v728 = vmax.f32 %v724, 0.0
    %s729 = scalar_lea.vmem [#allocation5], 224
    %v730 = vld [vmem:[%s729] sm:$0xff]
    %v731 = vld [vmem:[%s729 + $0x8] sm:$0xff]
    %v732 = vld [vmem:[%s729 + $0x10] sm:$0xff]
    %v733 = vld [vmem:[%s729 + $0x18] sm:$0xff]
    %s734 = scalar_lea.vmem [#allocation7], 7
    %v735 = vld [vmem:[%s734] sm:$0x1]
    %v737 = vlaneseq
    %v738 = vshrl.u32 %v737, 7
    %v739 = vsub.s32 0, %v738
    %v740 = vrot.slane %v735, %v739
    %v743 = vsel %vm69, %v727, 0
    %v746 = vsel %vm69, %v728, 0
    %748 = vmatprep.subr.mxu0 0.0
    %749 = vmatpush1.msra.mxu0 0.0
    %750 = vmatprep.subr.mxu0 0.0
    %751 = vmatpush1.msra.mxu0 0.0
    %752 = vmatprep.subr.mxu0 0.0
    %753 = vmatpush1.msra.mxu0 0.0
    %754 = vmatprep.subr.mxu0 0.0
    %755 = vmatpush1.msra.mxu0 0.0
    %756 = vmatprep.subr.mxu0 0.0
    %757 = vmatpush1.msra.mxu0 0.0
    %758 = vmatprep.subr.mxu0 0.0
    %759 = vmatpush1.msra.mxu0 0.0
    %760 = vmatprep.subr.mxu0 0.0
    %761 = vmatpush1.msra.mxu0 0.0
    %762 = vmatprep.subr.mxu0 0.0
    %763 = vmatpush1.msra.mxu0 0.0
    %764 = vmatprep.subr.mxu0 0.0
    %765 = vmatpush1.msra.mxu0 0.0
    %766 = vmatprep.subr.mxu0 0.0
    %767 = vmatpush1.msra.mxu0 0.0
    %768 = vmatprep.subr.mxu0 0.0
    %769 = vmatpush1.msra.mxu0 0.0
    %770 = vmatprep.subr.mxu0 0.0
    %771 = vmatpush1.msra.mxu0 0.0
    %772 = vmatprep.subr.mxu0 0.0
    %773 = vmatpush1.msra.mxu0 %v733
    %774 = vmatprep.subr.mxu0 0.0
    %775 = vmatpush1.msra.mxu0 %v732
    %776 = vmatprep.subr.mxu0 0.0
    %777 = vmatpush1.msra.mxu0 %v731
    %778 = vmatprep.subr.mxu0 0.0
    %779 = vmatpush1.msra.mxu0 %v730
    %780 = vmatprep.subr.mxu0 0.0
    %781 = vmatpush2.msra.mxu0 0.0
    %782 = vmatprep.subr.mxu0 0.0
    %783 = vmatpush2.msra.mxu0 0.0
    %784 = vmatprep.subr.mxu0 0.0
    %785 = vmatpush2.msra.mxu0 0.0
    %786 = vmatprep.subr.mxu0 0.0
    %787 = vmatpush2.msra.mxu0 0.0
    %788 = vmatprep.subr.mxu0 0.0
    %789 = vmatpush2.msra.mxu0 0.0
    %790 = vmatprep.subr.mxu0 0.0
    %791 = vmatpush2.msra.mxu0 0.0
    %792 = vmatprep.subr.mxu0 0.0
    %793 = vmatpush2.msra.mxu0 0.0
    %794 = vmatprep.subr.mxu0 0.0
    %795 = vmatpush2.msra.mxu0 0.0
    %796 = vmatprep.subr.mxu0 0.0
    %797 = vmatpush2.msra.mxu0 0.0
    %798 = vmatprep.subr.mxu0 0.0
    %799 = vmatpush2.msra.mxu0 0.0
    %800 = vmatprep.subr.mxu0 0.0
    %801 = vmatpush2.msra.mxu0 0.0
    %802 = vmatprep.subr.mxu0 0.0
    %803 = vmatpush2.msra.mxu0 0.0
    %804 = vmatprep.subr.mxu0 0.0
    %805 = vmatpush2.msra.mxu0 0.0
    %806 = vmatprep.subr.mxu0 0.0
    %807 = vmatpush2.msra.mxu0 0.0
    %808 = vmatprep.subr.mxu0 0.0
    %809 = vmatpush2.msra.mxu0 0.0
    %810 = vmatprep.subr.mxu0 0.0
    %811 = vmatpush2.msra.mxu0 0.0
    %812 = vmatprep.mubr.f32.mxu0 0.0
    %813 = vmatmul.mubr.f32.gmra.mxu0 %v743
    %v814 = vpop.f32.mrf.mxu0
    %v815 = vadd.f32 %v740, %v814
    %v816 = vpop.f32.mrf.mxu0
    %817 = vmatprep.mubr.f32.mxu0 0.0
    %818 = vmatmul.mubr.f32.gmra.mxu0 %v746
    %v819 = vpop.f32.mrf.mxu0
    %v820 = vadd.f32 %v740, %v819
    %v821 = vpop.f32.mrf.mxu0
    %822 = vdwg.mxu0
    %v823 = vmax.f32 %v815, 0.0
    %v824 = vmax.f32 %v820, 0.0
    %s825 = scalar_lea.vmem [#allocation5], 256
    %v826 = vld [vmem:[%s825] sm:$0xff]
    %v827 = vld [vmem:[%s825 + $0x8] sm:$0xff]
    %v828 = vld [vmem:[%s825 + $0x10] sm:$0xff]
    %v829 = vld [vmem:[%s825 + $0x18] sm:$0xff]
    %s830 = scalar_lea.vmem [#allocation7], 8
    %v831 = vld [vmem:[%s830] sm:$0x1]
    %v833 = vlaneseq
    %v834 = vshrl.u32 %v833, 7
    %v835 = vsub.s32 0, %v834
    %v836 = vrot.slane %v831, %v835
    %v839 = vsel %vm69, %v823, 0
    %v842 = vsel %vm69, %v824, 0
    %844 = vmatprep.subr.mxu0 0.0
    %845 = vmatpush1.msra.mxu0 0.0
    %846 = vmatprep.subr.mxu0 0.0
    %847 = vmatpush1.msra.mxu0 0.0
    %848 = vmatprep.subr.mxu0 0.0
    %849 = vmatpush1.msra.mxu0 0.0
    %850 = vmatprep.subr.mxu0 0.0
    %851 = vmatpush1.msra.mxu0 0.0
    %852 = vmatprep.subr.mxu0 0.0
    %853 = vmatpush1.msra.mxu0 0.0
    %854 = vmatprep.subr.mxu0 0.0
    %855 = vmatpush1.msra.mxu0 0.0
    %856 = vmatprep.subr.mxu0 0.0
    %857 = vmatpush1.msra.mxu0 0.0
    %858 = vmatprep.subr.mxu0 0.0
    %859 = vmatpush1.msra.mxu0 0.0
    %860 = vmatprep.subr.mxu0 0.0
    %861 = vmatpush1.msra.mxu0 0.0
    %862 = vmatprep.subr.mxu0 0.0
    %863 = vmatpush1.msra.mxu0 0.0
    %864 = vmatprep.subr.mxu0 0.0
    %865 = vmatpush1.msra.mxu0 0.0
    %866 = vmatprep.subr.mxu0 0.0
    %867 = vmatpush1.msra.mxu0 0.0
    %868 = vmatprep.subr.mxu0 0.0
    %869 = vmatpush1.msra.mxu0 %v829
    %870 = vmatprep.subr.mxu0 0.0
    %871 = vmatpush1.msra.mxu0 %v828
    %872 = vmatprep.subr.mxu0 0.0
    %873 = vmatpush1.msra.mxu0 %v827
    %874 = vmatprep.subr.mxu0 0.0
    %875 = vmatpush1.msra.mxu0 %v826
    %876 = vmatprep.subr.mxu0 0.0
    %877 = vmatpush2.msra.mxu0 0.0
    %878 = vmatprep.subr.mxu0 0.0
    %879 = vmatpush2.msra.mxu0 0.0
    %880 = vmatprep.subr.mxu0 0.0
    %881 = vmatpush2.msra.mxu0 0.0
    %882 = vmatprep.subr.mxu0 0.0
    %883 = vmatpush2.msra.mxu0 0.0
    %884 = vmatprep.subr.mxu0 0.0
    %885 = vmatpush2.msra.mxu0 0.0
    %886 = vmatprep.subr.mxu0 0.0
    %887 = vmatpush2.msra.mxu0 0.0
    %888 = vmatprep.subr.mxu0 0.0
    %889 = vmatpush2.msra.mxu0 0.0
    %890 = vmatprep.subr.mxu0 0.0
    %891 = vmatpush2.msra.mxu0 0.0
    %892 = vmatprep.subr.mxu0 0.0
    %893 = vmatpush2.msra.mxu0 0.0
    %894 = vmatprep.subr.mxu0 0.0
    %895 = vmatpush2.msra.mxu0 0.0
    %896 = vmatprep.subr.mxu0 0.0
    %897 = vmatpush2.msra.mxu0 0.0
    %898 = vmatprep.subr.mxu0 0.0
    %899 = vmatpush2.msra.mxu0 0.0
    %900 = vmatprep.subr.mxu0 0.0
    %901 = vmatpush2.msra.mxu0 0.0
    %902 = vmatprep.subr.mxu0 0.0
    %903 = vmatpush2.msra.mxu0 0.0
    %904 = vmatprep.subr.mxu0 0.0
    %905 = vmatpush2.msra.mxu0 0.0
    %906 = vmatprep.subr.mxu0 0.0
    %907 = vmatpush2.msra.mxu0 0.0
    %908 = vmatprep.mubr.f32.mxu0 0.0
    %909 = vmatmul.mubr.f32.gmra.mxu0 %v839
    %v910 = vpop.f32.mrf.mxu0
    %v911 = vadd.f32 %v836, %v910
    %v912 = vpop.f32.mrf.mxu0
    %913 = vmatprep.mubr.f32.mxu0 0.0
    %914 = vmatmul.mubr.f32.gmra.mxu0 %v842
    %v915 = vpop.f32.mrf.mxu0
    %v916 = vadd.f32 %v836, %v915
    %v917 = vpop.f32.mrf.mxu0
    %918 = vdwg.mxu0
    %v919 = vmax.f32 %v911, 0.0
    %v920 = vmax.f32 %v916, 0.0
    %s921 = scalar_lea.vmem [#allocation5], 288
    %v922 = vld [vmem:[%s921] sm:$0xff]
    %v923 = vld [vmem:[%s921 + $0x8] sm:$0xff]
    %v924 = vld [vmem:[%s921 + $0x10] sm:$0xff]
    %v925 = vld [vmem:[%s921 + $0x18] sm:$0xff]
    %s926 = scalar_lea.vmem [#allocation7], 9
    %v927 = vld [vmem:[%s926] sm:$0x1]
    %v929 = vlaneseq
    %v930 = vshrl.u32 %v929, 7
    %v931 = vsub.s32 0, %v930
    %v932 = vrot.slane %v927, %v931
    %v935 = vsel %vm69, %v919, 0
    %v938 = vsel %vm69, %v920, 0
    %940 = vmatprep.subr.mxu0 0.0
    %941 = vmatpush1.msra.mxu0 0.0
    %942 = vmatprep.subr.mxu0 0.0
    %943 = vmatpush1.msra.mxu0 0.0
    %944 = vmatprep.subr.mxu0 0.0
    %945 = vmatpush1.msra.mxu0 0.0
    %946 = vmatprep.subr.mxu0 0.0
    %947 = vmatpush1.msra.mxu0 0.0
    %948 = vmatprep.subr.mxu0 0.0
    %949 = vmatpush1.msra.mxu0 0.0
    %950 = vmatprep.subr.mxu0 0.0
    %951 = vmatpush1.msra.mxu0 0.0
    %952 = vmatprep.subr.mxu0 0.0
    %953 = vmatpush1.msra.mxu0 0.0
    %954 = vmatprep.subr.mxu0 0.0
    %955 = vmatpush1.msra.mxu0 0.0
    %956 = vmatprep.subr.mxu0 0.0
    %957 = vmatpush1.msra.mxu0 0.0
    %958 = vmatprep.subr.mxu0 0.0
    %959 = vmatpush1.msra.mxu0 0.0
    %960 = vmatprep.subr.mxu0 0.0
    %961 = vmatpush1.msra.mxu0 0.0
    %962 = vmatprep.subr.mxu0 0.0
    %963 = vmatpush1.msra.mxu0 0.0
    %964 = vmatprep.subr.mxu0 0.0
    %965 = vmatpush1.msra.mxu0 %v925
    %966 = vmatprep.subr.mxu0 0.0
    %967 = vmatpush1.msra.mxu0 %v924
    %968 = vmatprep.subr.mxu0 0.0
    %969 = vmatpush1.msra.mxu0 %v923
    %970 = vmatprep.subr.mxu0 0.0
    %971 = vmatpush1.msra.mxu0 %v922
    %972 = vmatprep.subr.mxu0 0.0
    %973 = vmatpush2.msra.mxu0 0.0
    %974 = vmatprep.subr.mxu0 0.0
    %975 = vmatpush2.msra.mxu0 0.0
    %976 = vmatprep.subr.mxu0 0.0
    %977 = vmatpush2.msra.mxu0 0.0
    %978 = vmatprep.subr.mxu0 0.0
    %979 = vmatpush2.msra.mxu0 0.0
    %980 = vmatprep.subr.mxu0 0.0
    %981 = vmatpush2.msra.mxu0 0.0
    %982 = vmatprep.subr.mxu0 0.0
    %983 = vmatpush2.msra.mxu0 0.0
    %984 = vmatprep.subr.mxu0 0.0
    %985 = vmatpush2.msra.mxu0 0.0
    %986 = vmatprep.subr.mxu0 0.0
    %987 = vmatpush2.msra.mxu0 0.0
    %988 = vmatprep.subr.mxu0 0.0
    %989 = vmatpush2.msra.mxu0 0.0
    %990 = vmatprep.subr.mxu0 0.0
    %991 = vmatpush2.msra.mxu0 0.0
    %992 = vmatprep.subr.mxu0 0.0
    %993 = vmatpush2.msra.mxu0 0.0
    %994 = vmatprep.subr.mxu0 0.0
    %995 = vmatpush2.msra.mxu0 0.0
    %996 = vmatprep.subr.mxu0 0.0
    %997 = vmatpush2.msra.mxu0 0.0
    %998 = vmatprep.subr.mxu0 0.0
    %999 = vmatpush2.msra.mxu0 0.0
    %1000 = vmatprep.subr.mxu0 0.0
    %1001 = vmatpush2.msra.mxu0 0.0
    %1002 = vmatprep.subr.mxu0 0.0
    %1003 = vmatpush2.msra.mxu0 0.0
    %1004 = vmatprep.mubr.f32.mxu0 0.0
    %1005 = vmatmul.mubr.f32.gmra.mxu0 %v935
    %v1006 = vpop.f32.mrf.mxu0
    %v1007 = vadd.f32 %v932, %v1006
    %v1008 = vpop.f32.mrf.mxu0
    %1009 = vmatprep.mubr.f32.mxu0 0.0
    %1010 = vmatmul.mubr.f32.gmra.mxu0 %v938
    %v1011 = vpop.f32.mrf.mxu0
    %v1012 = vadd.f32 %v932, %v1011
    %v1013 = vpop.f32.mrf.mxu0
    %1014 = vdwg.mxu0
    %1015 = vst.msk [vmem:[#allocation8] sm:$0xff] %vm69, %v1007
    %1016 = vst.msk [vmem:[#allocation8 + $0x8] sm:$0xff] %vm69, %v1012
    // Predicated region
    $region26: #{tpu_custom_call.1} parent=1 // pred_check
      _
    $region27: #{tpu_custom_call.1} parent=1 // pred_check_branch
      %1018 = sbr.rel (0) target = $region29
    $region28: #{tpu_custom_call.1} parent=1 // pred_region
      %s1020 = ssub.s32 256, 256
      %1021 = vsyncadd [#allocation4], %s1020
      %s1022 = sshll.u32 [#allocation8], 4
      %s1023 = int_to_ptr.vmem [resolvable:$true] %s1022
      %1028 = dma.vmem_to_hbm [thread:$0]  %s1023, 256, %s3, [#allocation4], 128, 128, 8
    $region29: #{tpu_custom_call.1} parent=1 // pred_fallthru
      _
    // Predicated region
    $region30: #{tpu_custom_call.1} parent=1 // pred_check
      _
    $region31: #{tpu_custom_call.1} parent=1 // pred_check_branch
      %1030 = sbr.rel (0) target = $region33
    $region32: #{tpu_custom_call.1} parent=1 // pred_region
      %1031 = dma.done [#allocation4], 256
    $region33: #{tpu_custom_call.1} parent=1 // pred_fallthru
      _
    %1032 = vsyncpa [#allocation3], 1
    %1033 = vsyncpa [#allocation6], 1
    %1034 = vsyncpa [#allocation4], 1

</llo_original>
